<compile_context>
chip_gen: v5e
topology: v5e:2x2
jax: 0.10.0
libtpu: 0.0.40
codegen_flags: <defaults>
</compile_context>

<pallas_src>
import jax
import jax.numpy as jnp
from jax.experimental import pallas as pl
from jax.experimental.pallas import tpu as pltpu


_LANE = 128
_DEFAULT_BLOCK_BYTES = 4 << 20   # ~4 MiB padded per-buffer target (v5e/v6e/v7x safe)
_VMEM_CEILING = 56 << 20         # stay under v7x's 64 MiB physical VMEM (+ Mosaic scratch)


def _round_up(a, b):
    return -(-a // b) * b


def _sublane_multiple(itemsize):
    # f32 -> 8, bf16/f16 -> 16, int8/fp8 -> 32 (native sublane packing).
    return 8 * max(1, 4 // itemsize)


# ------------------------------- kernel --------------------------------------


def _mask_mul_kernel(x_ref, m_ref, o_ref):
    # Row-tiled path:  x/o: (tb, tn, M),  m: (1, tn, M)   (broadcast over dim 0)
    # Flattened path:  x/o: (tb, tl),     m: (1, tl)      (broadcast over dim 0)
    o_ref[...] = (x_ref[...].astype(o_ref.dtype) * m_ref[...]).astype(o_ref.dtype)


# ------------------------------- wrapper -------------------------------------


def neigh_masking_batch(x, neig_mask, *, target_block_bytes=_DEFAULT_BLOCK_BYTES):
    """y = x * broadcast(neig_mask) over batch (== torch input * neigMask.repeat(bs,1,1)).

    x:         (B, N, M)
    neig_mask: (N, M) or (1, N, M)
    returns    (B, N, M) with dtype = result_type(x, neig_mask)  (torch promotion)
    """
    assert x.ndim == 3, "input must be (batch, N, M)"
    if neig_mask.ndim == 3:
        assert neig_mask.shape[0] == 1, "3-D mask must have a leading dim of 1"
        neig_mask = neig_mask[0]
    B, N, M = x.shape
    assert neig_mask.shape == (N, M)

    # Torch promotion semantics: bf16 * f32 mask -> f32 output, etc.
    out_dtype = jnp.result_type(x.dtype, neig_mask.dtype)
    mask = neig_mask.astype(out_dtype)          # mask is small; cast once host-side
    isz_x = jnp.dtype(x.dtype).itemsize
    isz_o = jnp.dtype(out_dtype).itemsize
    sub = max(_sublane_multiple(isz_x), _sublane_multiple(isz_o))

    target = max(int(target_block_bytes), sub * _LANE * isz_o)   # >= one native tile

    pad_m = _round_up(M, _LANE)
    # Choose the layout with the smaller padding waste:
    #   row-tiled (B, N, M): lane waste = round_up(M,128)/M
    #   flattened (B, N*M):  sublane waste = round_up(B,sub)/B  (only if B < sub)
    waste_rows = pad_m / M
    waste_flat = (_round_up(B, sub) / B) if B < sub else 1.0
    use_flat = (waste_rows > 1.125) and (waste_flat < waste_rows)

    if not use_flat:
        # ---------------- row-tiled 3-D layout: blocks (tb, tn, M) ----------------
        slab_pad = _round_up(N, sub) * pad_m * isz_o    # padded bytes of one (N, M) slab
        if slab_pad <= target:
            tn = N
            tb = max(1, min(B, target // slab_pad))     # pack batch elements per block
        else:
            tb = 1
            tn = (target // (pad_m * isz_o)) // sub * sub
            tn = max(tn, sub)                           # tn < N guaranteed here

        grid = (pl.cdiv(N, tn), pl.cdiv(B, tb))         # batch innermost -> mask resident
        x_spec = pl.BlockSpec((tb, tn, M), lambda i, b: (b, i, 0))
        m_spec = pl.BlockSpec((1, tn, M), lambda i, b: (0, i, 0))
        o_spec = pl.BlockSpec((tb, tn, M), lambda i, b: (b, i, 0))
        in_arrays = (x, mask.reshape(1, N, M))
        out_shape = jax.ShapeDtypeStruct((B, N, M), out_dtype)
        reshape_out = None

        tn_pad = _round_up(tn, sub)
        x_vmem = tb * tn_pad * pad_m * isz_x
        o_vmem = tb * tn_pad * pad_m * isz_o
        m_vmem = tn_pad * pad_m * isz_o
    else:
        # ---------------- flattened lane-dense 2-D layout: blocks (tb, tl) --------
        L = N * M
        if _round_up(B, sub) * _LANE * isz_o <= target:
            tb = B                                      # full batch per block
            tl = (target // (_round_up(B, sub) * isz_o)) // _LANE * _LANE
            if tl >= L:
                tl = L
        else:                                           # very large batch: tile both axes
            tb = max(sub, (target // (_LANE * isz_o)) // sub * sub)
            tb = min(tb, B)
            tl = max(_LANE, (target // (_round_up(tb, sub) * isz_o)) // _LANE * _LANE)
            if tl >= L:
                tl = L

        grid = (pl.cdiv(L, tl), pl.cdiv(B, tb))         # batch innermost -> mask resident
        x_spec = pl.BlockSpec((tb, tl), lambda i, b: (b, i))
        m_spec = pl.BlockSpec((1, tl), lambda i, b: (0, i))
        o_spec = pl.BlockSpec((tb, tl), lambda i, b: (b, i))
        in_arrays = (x.reshape(B, L), mask.reshape(1, L))
        out_shape = jax.ShapeDtypeStruct((B, L), out_dtype)
        reshape_out = (B, N, M)

        tb_pad = _round_up(tb, sub)
        tl_pad = _round_up(tl, _LANE)
        x_vmem = tb_pad * tl_pad * isz_x
        o_vmem = tb_pad * tl_pad * isz_o
        m_vmem = sub * tl_pad * isz_o

    # Real pipelined footprint: double buffers for x, out and the mask (the mask
    # buffers are accounted for here instead of single-buffering them).
    footprint = 2 * (x_vmem + o_vmem + m_vmem)
    vmem_limit = footprint + (8 << 20)
    if vmem_limit > _VMEM_CEILING:
        raise ValueError(
            f"target_block_bytes={target} needs ~{footprint >> 20} MiB of pipelined "
            f"VMEM (> {_VMEM_CEILING >> 20} MiB budget); use a smaller target.")
    vmem_limit = max(vmem_limit, 16 << 20)

    out = pl.pallas_call(
        _mask_mul_kernel,
        out_shape=out_shape,
        grid_spec=pltpu.PrefetchScalarGridSpec(
            num_scalar_prefetch=0,
            grid=grid,
            in_specs=[x_spec, m_spec],
            out_specs=o_spec,
        ),
        compiler_params=pltpu.CompilerParams(
            # All blocks are independent -> let megacore shard either axis (v7x).
            dimension_semantics=("parallel", "parallel"),
            vmem_limit_bytes=int(vmem_limit),
        ),
    )(*in_arrays)

    if reshape_out is not None:
        out = out.reshape(reshape_out)
    return out


# --------------------------------- demo --------------------------------------

if __name__ == "__main__":
    key = jax.random.PRNGKey(0)
    keys = jax.random.split(key, 8)

    def _ref(x, m):
        if m.ndim == 3:
            m = m[0]
        dt = jnp.result_type(x.dtype, m.dtype)
        return x.astype(dt) * m.astype(dt)[None, :, :]

    # Case 1: canonical small shapes (batch=2, N=64 nodes, M=128 neighbours),
    # f32 binary mask. Whole problem fits one block -> single-step grid.
    x1 = jax.random.normal(keys[0], (2, 64, 128), dtype=jnp.float32)
    m1 = (jax.random.uniform(keys[1], (64, 128)) > 0.5).astype(jnp.float32)
    y1 = jax.block_until_ready(neigh_masking_batch(x1, m1))
    assert y1.shape == (2, 64, 128) and y1.dtype == jnp.float32
    assert jnp.allclose(y1, _ref(x1, m1)), "case 1 mismatch"

    # Case 2: bf16 input with a weighted float32 (1, N, M) mask -> torch-style
    # promotion to float32; M not a multiple of 128, N not a multiple of 16.
    x2 = jax.random.normal(keys[2], (2, 24, 100), dtype=jnp.bfloat16)
    m2 = jax.random.uniform(keys[3], (1, 24, 100), dtype=jnp.float32)
    y2 = jax.block_until_ready(neigh_masking_batch(x2, m2))
    assert y2.dtype == jnp.float32
    assert jnp.allclose(y2, _ref(x2, m2)), "case 2 mismatch"

    # Case 3: force the multi-step row-tiled path (grid (2, 2); mask block stays
    # resident across the inner batch steps).
    y3 = jax.block_until_ready(neigh_masking_batch(x1, m1, target_block_bytes=16 << 10))
    assert jnp.allclose(y3, _ref(x1, m1)), "case 3 mismatch"

    # Case 4: lane-sparse M (50) with batch >= 8 -> flattened lane-dense layout,
    # cdiv grid with a partial tail block on the flattened axis.
    x4 = jax.random.normal(keys[4], (16, 8, 50), dtype=jnp.float32)
    m4 = (jax.random.uniform(keys[5], (8, 50)) > 0.3).astype(jnp.float32)
    y4 = jax.block_until_ready(neigh_masking_batch(x4, m4, target_block_bytes=8 << 10))
    assert jnp.allclose(y4, _ref(x4, m4)), "case 4 mismatch"

    # Case 5: flattened layout with a tiled batch axis and a partial batch tail.
    x5 = jax.random.normal(keys[6], (20, 4, 30), dtype=jnp.float32)
    m5 = jax.random.uniform(keys[7], (4, 30), dtype=jnp.float32)
    y5 = jax.block_until_ready(neigh_masking_batch(x5, m5, target_block_bytes=4 << 10))
    assert jnp.allclose(y5, _ref(x5, m5)), "case 5 mismatch"

    print("KERNEL_OK")
</pallas_src>

<mosaic_0001>
module attributes {stable_mosaic.version = 11 : i64} {
  func.func @_mask_mul_kernel(%arg0: i32, %arg1: i32, %arg2: memref<2x64x128xf32, #tpu.memory_space<vmem>>, %arg3: memref<1x64x128xf32, #tpu.memory_space<vmem>>, %arg4: memref<2x64x128xf32, #tpu.memory_space<vmem>>) attributes {dimension_semantics = [#tpu.dimension_semantics<parallel>, #tpu.dimension_semantics<parallel>], iteration_bounds = array<i64: 1, 1>, scalar_prefetch = 0 : i64, scratch_operands = 0 : i64, tpu.core_type = #tpu.core_type<tc>, window_params = [{transform_indices = @transform_0, window_bounds = array<i64: 2, 64, 128>}, {transform_indices = @transform_1, window_bounds = array<i64: 1, 64, 128>}, {transform_indices = @transform_2, window_bounds = array<i64: 2, 64, 128>}]} {
    %c0 = arith.constant 0 : index
    %c0_0 = arith.constant 0 : index
    %c0_1 = arith.constant 0 : index
    %0 = vector.load %arg2[%c0, %c0_0, %c0_1] : memref<2x64x128xf32, #tpu.memory_space<vmem>>, vector<2x64x128xf32>
    %c0_2 = arith.constant 0 : index
    %c0_3 = arith.constant 0 : index
    %c0_4 = arith.constant 0 : index
    %1 = vector.load %arg3[%c0_2, %c0_3, %c0_4] : memref<1x64x128xf32, #tpu.memory_space<vmem>>, vector<1x64x128xf32>
    %2 = vector.broadcast %1 : vector<1x64x128xf32> to vector<2x64x128xf32>
    %3 = arith.mulf %0, %2 : vector<2x64x128xf32>
    %c0_5 = arith.constant 0 : index
    %c0_6 = arith.constant 0 : index
    %c0_7 = arith.constant 0 : index
    %4 = vector.load %arg4[%c0_5, %c0_6, %c0_7] : memref<2x64x128xf32, #tpu.memory_space<vmem>>, vector<2x64x128xf32>
    tpu.vector_store %arg4[%c0_5, %c0_6, %c0_7], %3 {strides = array<i32>} : memref<2x64x128xf32, #tpu.memory_space<vmem>>, vector<2x64x128xf32>,
    return
  }
  func.func @transform_0(%arg0: i32, %arg1: i32) -> (i32, i32, i32) {
    %c0_i32 = arith.constant 0 : i32
    %c0_i32_0 = arith.constant 0 : i32
    return %arg1, %arg0, %c0_i32 : i32, i32, i32
  }
  func.func @transform_1(%arg0: i32, %arg1: i32) -> (i32, i32, i32) {
    %c0_i32 = arith.constant 0 : i32
    %c0_i32_0 = arith.constant 0 : i32
    %c0_i32_1 = arith.constant 0 : i32
    return %c0_i32, %arg0, %c0_i32_0 : i32, i32, i32
  }
  func.func @transform_2(%arg0: i32, %arg1: i32) -> (i32, i32, i32) {
    %c0_i32 = arith.constant 0 : i32
    %c0_i32_0 = arith.constant 0 : i32
    return %arg1, %arg0, %c0_i32 : i32, i32, i32
  }
}

</mosaic_0001>

<llo_original>
// kernel: tpu_custom_call.1
$region0: #{tpu_custom_call.1}
  #allocation0 [shape = 'u32[]', space=smem, size = 0x4, offset = 0x4, fixed_abs, tag = 'smem constant byte address 0x4 - core index']
  #allocation1 [shape = 'u32[72,128]{1,0:T(1,128)}', space=vmem, size = 0x9000, scoped, tag = 'internal scratch']
  %s0 = inlined_call_operand.hbm [shape: f32[2,64,128], index: 0, kind: input, shape index: {}]
  %s1 = inlined_call_operand.hbm [shape: f32[1,64,128], index: 1, kind: input, shape index: {}]
  %s2 = inlined_call_operand.hbm [shape: f32[2,64,128], index: 2, kind: output, shape index: {}]
  %s3 = sld [smem:[#allocation0]]
  $region26: #{tpu_custom_call.1} parent=0
    _
  %s5 = ssub.s32 1, %s3
  %s6 = scalar_select 0, %s5, %s3
  $region1: #{tpu_custom_call.1} parent=0
    #allocation2 [shape = 'u8[65536]{0}', space=vmem, size = 0x10000, scoped, tag = 'input window, operand 0, single buffered']
    #allocation3 [shape = 's32[1]{0}', space=sflag, size = 0x4, scoped, tag = 'scoped memory for tpu_custom_call.1']
    #allocation4 [shape = 's32[1]{0}', space=sflag, size = 0x4, scoped, tag = 'scoped memory for tpu_custom_call.1']
    #allocation5 [shape = 'u8[32768]{0}', space=vmem, size = 0x8000, scoped, tag = 'input window, operand 1, single buffered']
    #allocation6 [shape = 's32[1]{0}', space=sflag, size = 0x4, scoped, tag = 'scoped memory for tpu_custom_call.1']
    #allocation7 [shape = 'u8[65536]{0}', space=vmem, size = 0x10000, scoped, tag = 'output window, operand 0, single buffered']
    %7 = vsyncpa [#allocation3], 0
    %8 = vsyncpa [#allocation6], 0
    %9 = vsyncpa [#allocation4], 0
    // Predicated region
    $region2: #{tpu_custom_call.1} parent=1 // pred_check
      _
    $region3: #{tpu_custom_call.1} parent=1 // pred_check_branch
      %11 = sbr.rel (0) target = $region5
    $region4: #{tpu_custom_call.1} parent=1 // pred_region
      %13 = vsyncadd [#allocation3], 0
      %s14 = sshll.u32 %s0, 4
      %s15 = int_to_ptr.hbm [resolvable:$true] %s14
      %s16 = sshll.u32 [#allocation2], 4
      %s17 = int_to_ptr.vmem [resolvable:$true] %s16
      %22 = dma.hbm_to_vmem [thread:$0]  %s15, 2048, %s17, [#allocation3], 128, 128, 8
    $region5: #{tpu_custom_call.1} parent=1 // pred_fallthru
      _
    // Predicated region
    $region6: #{tpu_custom_call.1} parent=1 // pred_check
      _
    $region7: #{tpu_custom_call.1} parent=1 // pred_check_branch
      %24 = sbr.rel (0) target = $region9
    $region8: #{tpu_custom_call.1} parent=1 // pred_region
      %26 = vsyncadd [#allocation6], 0
      %s27 = sshll.u32 %s1, 4
      %s28 = int_to_ptr.hbm [resolvable:$true] %s27
      %s29 = sshll.u32 [#allocation5], 4
      %s30 = int_to_ptr.vmem [resolvable:$true] %s29
      %35 = dma.hbm_to_vmem [thread:$0]  %s28, 1024, %s30, [#allocation6], 128, 128, 8
    $region9: #{tpu_custom_call.1} parent=1 // pred_fallthru
      _
    // Predicated region
    $region10: #{tpu_custom_call.1} parent=1 // pred_check
      _
    $region11: #{tpu_custom_call.1} parent=1 // pred_check_branch
      %37 = sbr.rel (0) target = $region13
    $region12: #{tpu_custom_call.1} parent=1 // pred_region
      %39 = dma.done [#allocation3], 2048
    $region13: #{tpu_custom_call.1} parent=1 // pred_fallthru
      _
    // Predicated region
    $region14: #{tpu_custom_call.1} parent=1 // pred_check
      _
    $region15: #{tpu_custom_call.1} parent=1 // pred_check_branch
      %41 = sbr.rel (0) target = $region17
    $region16: #{tpu_custom_call.1} parent=1 // pred_region
      %43 = dma.done [#allocation6], 1024
    $region17: #{tpu_custom_call.1} parent=1 // pred_fallthru
      _
    %v44 = vld [vmem:[#allocation2] sm:$0xff]
    %v45 = vld [vmem:[#allocation2 + $0x8] sm:$0xff]
    %v46 = vld [vmem:[#allocation2 + $0x10] sm:$0xff]
    %v47 = vld [vmem:[#allocation2 + $0x18] sm:$0xff]
    %v48 = vld [vmem:[#allocation2 + $0x20] sm:$0xff]
    %v49 = vld [vmem:[#allocation2 + $0x28] sm:$0xff]
    %v50 = vld [vmem:[#allocation2 + $0x30] sm:$0xff]
    %v51 = vld [vmem:[#allocation2 + $0x38] sm:$0xff]
    %v52 = vld [vmem:[#allocation2 + $0x40] sm:$0xff]
    %v53 = vld [vmem:[#allocation2 + $0x48] sm:$0xff]
    %v54 = vld [vmem:[#allocation2 + $0x50] sm:$0xff]
    %v55 = vld [vmem:[#allocation2 + $0x58] sm:$0xff]
    %v56 = vld [vmem:[#allocation2 + $0x60] sm:$0xff]
    %v57 = vld [vmem:[#allocation2 + $0x68] sm:$0xff]
    %v58 = vld [vmem:[#allocation2 + $0x70] sm:$0xff]
    %v59 = vld [vmem:[#allocation2 + $0x78] sm:$0xff]
    %v60 = vld [vmem:[#allocation5] sm:$0xff]
    %v61 = vld [vmem:[#allocation5 + $0x8] sm:$0xff]
    %v62 = vld [vmem:[#allocation5 + $0x10] sm:$0xff]
    %v63 = vld [vmem:[#allocation5 + $0x18] sm:$0xff]
    %v64 = vld [vmem:[#allocation5 + $0x20] sm:$0xff]
    %v65 = vld [vmem:[#allocation5 + $0x28] sm:$0xff]
    %v66 = vld [vmem:[#allocation5 + $0x30] sm:$0xff]
    %v67 = vld [vmem:[#allocation5 + $0x38] sm:$0xff]
    %v68 = vmul.f32 %v44, %v60
    %v69 = vmul.f32 %v45, %v61
    %v70 = vmul.f32 %v46, %v62
    %v71 = vmul.f32 %v47, %v63
    %v72 = vmul.f32 %v48, %v64
    %v73 = vmul.f32 %v49, %v65
    %v74 = vmul.f32 %v50, %v66
    %v75 = vmul.f32 %v51, %v67
    %v76 = vmul.f32 %v52, %v60
    %v77 = vmul.f32 %v53, %v61
    %v78 = vmul.f32 %v54, %v62
    %v79 = vmul.f32 %v55, %v63
    %v80 = vmul.f32 %v56, %v64
    %v81 = vmul.f32 %v57, %v65
    %v82 = vmul.f32 %v58, %v66
    %v83 = vmul.f32 %v59, %v67
    %84 = vst [vmem:[#allocation7] sm:$0xff] %v68
    %85 = vst [vmem:[#allocation7 + $0x8] sm:$0xff] %v69
    %86 = vst [vmem:[#allocation7 + $0x10] sm:$0xff] %v70
    %87 = vst [vmem:[#allocation7 + $0x18] sm:$0xff] %v71
    %88 = vst [vmem:[#allocation7 + $0x20] sm:$0xff] %v72
    %89 = vst [vmem:[#allocation7 + $0x28] sm:$0xff] %v73
    %90 = vst [vmem:[#allocation7 + $0x30] sm:$0xff] %v74
    %91 = vst [vmem:[#allocation7 + $0x38] sm:$0xff] %v75
    %92 = vst [vmem:[#allocation7 + $0x40] sm:$0xff] %v76
    %93 = vst [vmem:[#allocation7 + $0x48] sm:$0xff] %v77
    %94 = vst [vmem:[#allocation7 + $0x50] sm:$0xff] %v78
    %95 = vst [vmem:[#allocation7 + $0x58] sm:$0xff] %v79
    %96 = vst [vmem:[#allocation7 + $0x60] sm:$0xff] %v80
    %97 = vst [vmem:[#allocation7 + $0x68] sm:$0xff] %v81
    %98 = vst [vmem:[#allocation7 + $0x70] sm:$0xff] %v82
    %99 = vst [vmem:[#allocation7 + $0x78] sm:$0xff] %v83
    // Predicated region
    $region18: #{tpu_custom_call.1} parent=1 // pred_check
      _
    $region19: #{tpu_custom_call.1} parent=1 // pred_check_branch
      %101 = sbr.rel (0) target = $region21
    $region20: #{tpu_custom_call.1} parent=1 // pred_region
      %103 = vsyncadd [#allocation4], 0
      %s104 = sshll.u32 [#allocation7], 4
      %s105 = int_to_ptr.vmem [resolvable:$true] %s104
      %s106 = sshll.u32 %s2, 4
      %s107 = int_to_ptr.hbm [resolvable:$true] %s106
      %112 = dma.vmem_to_hbm [thread:$0]  %s105, 2048, %s107, [#allocation4], 128, 128, 8
    $region21: #{tpu_custom_call.1} parent=1 // pred_fallthru
      _
    // Predicated region
    $region22: #{tpu_custom_call.1} parent=1 // pred_check
      _
    $region23: #{tpu_custom_call.1} parent=1 // pred_check_branch
      %114 = sbr.rel (0) target = $region25
    $region24: #{tpu_custom_call.1} parent=1 // pred_region
      %116 = dma.done [#allocation4], 2048
    $region25: #{tpu_custom_call.1} parent=1 // pred_fallthru
      _
    %117 = vsyncpa [#allocation3], 1
    %118 = vsyncpa [#allocation6], 1
    %119 = vsyncpa [#allocation4], 1

</llo_original>
